<compile_context>
chip_gen: v7x
topology: tpu7x:2x2x1
jax: 0.10.0
libtpu: 0.0.40
codegen_flags: <defaults>
</compile_context>

<pallas_src>
import functools
import math

import jax
import jax.numpy as jnp
from jax.experimental import pallas as pl
from jax.experimental.pallas import tpu as pltpu

_LANES = 128


def _std_pool_kernel(x_ref, o_ref, sum_ref, sq_ref, *, n_total, ts, lanes, rem):
    """One (row-tile, spatial-tile) grid step of StdGPool.

    x_ref:   (TC, TS)    VMEM  tile of the flattened input (native dtype)
    o_ref:   (TC, 1)     VMEM  per-row std (written on the last spatial tile)
    sum_ref: (TC, lanes) VMEM  f32 lane-dense running-sum accumulator
    sq_ref:  (TC, lanes) VMEM  f32 lane-dense running sum-of-squares
    """
    s_idx = pl.program_id(1)
    num_s = pl.num_programs(1)

    @pl.when(s_idx == 0)
    def _():
        sum_ref[...] = jnp.zeros_like(sum_ref)
        sq_ref[...] = jnp.zeros_like(sq_ref)

    n_chunks = ts // lanes  # ts % lanes == 0 (or ts == lanes) by construction

    def accumulate(valid):
        # `valid` is a STATIC int: number of in-range lanes in this tile.
        s_acc = sum_ref[...]
        q_acc = sq_ref[...]
        lane_iota = None
        for k in range(n_chunks):
            lo = k * lanes
            if lo >= valid:
                break                                   # fully OOB chunk: skip
            chunk = x_ref[:, lo:lo + lanes].astype(jnp.float32)   # (TC, lanes)
            if lo + lanes > valid:                      # ragged boundary chunk
                if lane_iota is None:
                    lane_iota = jax.lax.broadcasted_iota(jnp.int32, chunk.shape, 1)
                chunk = jnp.where(lane_iota < (valid - lo), chunk, 0.0)
            s_acc = s_acc + chunk
            q_acc = q_acc + chunk * chunk
        sum_ref[...] = s_acc
        sq_ref[...] = q_acc

    if rem == ts:
        # Every spatial tile is full: no masking anywhere.
        accumulate(ts)
    else:
        @pl.when(s_idx < num_s - 1)
        def _():
            accumulate(ts)

        @pl.when(s_idx == num_s - 1)
        def _():
            accumulate(rem)

    @pl.when(s_idx == num_s - 1)
    def _():
        n = jnp.float32(n_total)                         # true (unpadded) S
        total = jnp.sum(sum_ref[...], axis=-1, keepdims=True)    # (TC, 1) XLU
        total_sq = jnp.sum(sq_ref[...], axis=-1, keepdims=True)  # (TC, 1) XLU
        mean = total / n
        # Unbiased (ddof=1) variance, matching torch.Tensor.std default.
        # NOTE: single-pass E[x^2]-E[x]^2 in f32 is cancellation-prone when
        # |mean| >> std; n == 1 yields nan (same as torch).
        var = (total_sq - n * mean * mean) / (n - 1.0)
        var = jnp.maximum(var, 0.0)                      # guard fp round-off
        o_ref[...] = jnp.sqrt(var).astype(o_ref.dtype)


def std_gpool(x, *, vmem_tile_budget_bytes=8 * 1024 * 1024):
    """StdGPool forward: x (B, C, *spatial) -> (B, C) unbiased std over spatial."""
    B, C = x.shape[0], x.shape[1]
    S = int(math.prod(x.shape[2:]))
    R = B * C
    x_flat = x.reshape(R, S)                 # row-major reshape: free, native dtype

    itemsize = jnp.dtype(x.dtype).itemsize
    base = {4: 8, 2: 16, 1: 32}.get(itemsize, 8)     # sublane packing for dtype
    per_buf = max(vmem_tile_budget_bytes // 2, _LANES * base * itemsize)

    # --- spatial tile: lane-dense (multiple of 128) unless S itself is < 128 ---
    if S < _LANES:
        TS = S
        LW = S                                # accumulator lane width
    else:
        s_floor = (S // _LANES) * _LANES
        ts_cap = max(_LANES, (per_buf // (base * itemsize)) // _LANES * _LANES)
        TS = min(s_floor, ts_cap, 8192)       # 8192 caps the unrolled chunk loop
        LW = _LANES

    # --- row tile: full sublane occupancy, sized from the remaining budget ---
    if R <= base:
        TC = R                                # block == full row extent
    else:
        tc_cap = max(base, (per_buf // (TS * itemsize)) // base * base)
        TC = min(tc_cap, (R // base) * base)

    steps_s = -(-S // TS)
    steps_r = -(-R // TC)
    rem = S - (steps_s - 1) * TS              # static size of the last tile

    kernel = functools.partial(_std_pool_kernel, n_total=S, ts=TS, lanes=LW, rem=rem)

    out = pl.pallas_call(
        kernel,
        out_shape=jax.ShapeDtypeStruct((R, 1), x.dtype),
        grid_spec=pltpu.PrefetchScalarGridSpec(
            num_scalar_prefetch=0,
            grid=(steps_r, steps_s),
            in_specs=[pl.BlockSpec((TC, TS), lambda r, s: (r, s))],
            out_specs=pl.BlockSpec((TC, 1), lambda r, s: (r, 0)),
            scratch_shapes=[
                pltpu.VMEM((TC, LW), jnp.float32),   # lane-dense running sum
                pltpu.VMEM((TC, LW), jnp.float32),   # lane-dense running sum-sq
            ],
        ),
        compiler_params=pltpu.CompilerParams(
            dimension_semantics=("parallel", "arbitrary"),
            # Conservative for v7x (64 MiB physical / 32 MiB scoped VMEM); the
            # chunked f32 upcast keeps extra temporaries small.  Only raise this
            # gated per-generation (v5e/v6e have 128 MiB).
            vmem_limit_bytes=32 * 1024 * 1024,
        ),
        cost_estimate=pl.CostEstimate(
            flops=3 * R * S,
            transcendentals=0,
            bytes_accessed=R * S * itemsize + R * itemsize,
        ),
    )(x_flat)

    return out.reshape(B, C)


def std_gpool_reference(x):
    """Pure-JAX reference (torch.std default: unbiased, ddof=1)."""
    B, C = x.shape[0], x.shape[1]
    xf = x.reshape(B, C, -1).astype(jnp.float32)
    return jnp.std(xf, axis=-1, ddof=1).astype(x.dtype)


if __name__ == "__main__":
    # Small shapes consistent with the module: batch=2, channels=4, spatial 16x16.
    B, C, H, W = 2, 4, 16, 16

    key = jax.random.PRNGKey(0)
    x = jax.random.normal(key, (B, C, H, W), dtype=jnp.float32)

    out = jax.block_until_ready(std_gpool(x))
    ref = std_gpool_reference(x)

    assert out.shape == (B, C), out.shape
    assert jnp.allclose(out, ref, atol=1e-5, rtol=1e-5), "mismatch vs reference"

    print("KERNEL_OK")
</pallas_src>

<mosaic_0001>
module attributes {stable_mosaic.version = 11 : i64} {
  func.func @_std_pool_kernel(%arg0: i32, %arg1: i32, %arg2: memref<8x256xf32, #tpu.memory_space<vmem>>, %arg3: memref<8x1xf32, #tpu.memory_space<vmem>>, %arg4: memref<8x128xf32, #tpu.memory_space<vmem>>, %arg5: memref<8x128xf32, #tpu.memory_space<vmem>>) attributes {dimension_semantics = [#tpu.dimension_semantics<parallel>, #tpu.dimension_semantics<arbitrary>], iteration_bounds = array<i64: 1, 1>, scalar_prefetch = 0 : i64, scratch_operands = 2 : i64, tpu.core_type = #tpu.core_type<tc>, window_params = [{transform_indices = @transform_0, window_bounds = array<i64: 8, 256>}, {transform_indices = @transform_1, window_bounds = array<i64: 8, 1>}]} {
    %c0_i32 = arith.constant 0 : i32
    %0 = arith.cmpi eq, %arg1, %c0_i32 : i32
    %1 = arith.extui %0 : i1 to i32
    %c0_i32_0 = arith.constant 0 : i32
    %2 = arith.cmpi ne, %1, %c0_i32_0 : i32
    scf.if %2 {
      %cst = arith.constant 0.000000e+00 : f32
      %18 = vector.broadcast %cst : f32 to vector<8x128xf32>
      %c0_13 = arith.constant 0 : index
      %c0_14 = arith.constant 0 : index
      %19 = vector.load %arg4[%c0_13, %c0_14] : memref<8x128xf32, #tpu.memory_space<vmem>>, vector<8x128xf32>
      tpu.vector_store %arg4[%c0_13, %c0_14], %18 {strides = array<i32>} : memref<8x128xf32, #tpu.memory_space<vmem>>, vector<8x128xf32>,
      %cst_15 = arith.constant 0.000000e+00 : f32
      %20 = vector.broadcast %cst_15 : f32 to vector<8x128xf32>
      %c0_16 = arith.constant 0 : index
      %c0_17 = arith.constant 0 : index
      %21 = vector.load %arg5[%c0_16, %c0_17] : memref<8x128xf32, #tpu.memory_space<vmem>>, vector<8x128xf32>
      tpu.vector_store %arg5[%c0_16, %c0_17], %20 {strides = array<i32>} : memref<8x128xf32, #tpu.memory_space<vmem>>, vector<8x128xf32>,
    } else {
    }
    %c0 = arith.constant 0 : index
    %c0_1 = arith.constant 0 : index
    %3 = vector.load %arg4[%c0, %c0_1] : memref<8x128xf32, #tpu.memory_space<vmem>>, vector<8x128xf32>
    %c0_2 = arith.constant 0 : index
    %c0_3 = arith.constant 0 : index
    %4 = vector.load %arg5[%c0_2, %c0_3] : memref<8x128xf32, #tpu.memory_space<vmem>>, vector<8x128xf32>
    %c0_4 = arith.constant 0 : index
    %c0_5 = arith.constant 0 : index
    %5 = vector.load %arg2[%c0_4, %c0_5] : memref<8x256xf32, #tpu.memory_space<vmem>>, vector<8x128xf32>
    %6 = arith.addf %3, %5 : vector<8x128xf32>
    %7 = arith.mulf %5, %5 : vector<8x128xf32>
    %8 = arith.addf %4, %7 : vector<8x128xf32>
    %c0_6 = arith.constant 0 : index
    %c128 = arith.constant 128 : index
    %9 = vector.load %arg2[%c0_6, %c128] : memref<8x256xf32, #tpu.memory_space<vmem>>, vector<8x128xf32>
    %10 = arith.addf %6, %9 : vector<8x128xf32>
    %11 = arith.mulf %9, %9 : vector<8x128xf32>
    %12 = arith.addf %8, %11 : vector<8x128xf32>
    %c0_7 = arith.constant 0 : index
    %c0_8 = arith.constant 0 : index
    %13 = vector.load %arg4[%c0_7, %c0_8] : memref<8x128xf32, #tpu.memory_space<vmem>>, vector<8x128xf32>
    tpu.vector_store %arg4[%c0_7, %c0_8], %10 {strides = array<i32>} : memref<8x128xf32, #tpu.memory_space<vmem>>, vector<8x128xf32>,
    %c0_9 = arith.constant 0 : index
    %c0_10 = arith.constant 0 : index
    %14 = vector.load %arg5[%c0_9, %c0_10] : memref<8x128xf32, #tpu.memory_space<vmem>>, vector<8x128xf32>
    tpu.vector_store %arg5[%c0_9, %c0_10], %12 {strides = array<i32>} : memref<8x128xf32, #tpu.memory_space<vmem>>, vector<8x128xf32>,
    %c0_i32_11 = arith.constant 0 : i32
    %15 = arith.cmpi eq, %arg1, %c0_i32_11 : i32
    %16 = arith.extui %15 : i1 to i32
    %c0_i32_12 = arith.constant 0 : i32
    %17 = arith.cmpi ne, %16, %c0_i32_12 : i32
    scf.if %17 {
      %c0_13 = arith.constant 0 : index
      %c0_14 = arith.constant 0 : index
      %18 = vector.load %arg4[%c0_13, %c0_14] : memref<8x128xf32, #tpu.memory_space<vmem>>, vector<8x128xf32>
      %cst = arith.constant dense<0.000000e+00> : vector<8xf32>
      %19 = vector.multi_reduction <add>, %18, %cst [1] : vector<8x128xf32> to vector<8xf32>
      %20 = vector.shape_cast %19 : vector<8xf32> to vector<8x1xf32>
      %c0_15 = arith.constant 0 : index
      %c0_16 = arith.constant 0 : index
      %21 = vector.load %arg5[%c0_15, %c0_16] : memref<8x128xf32, #tpu.memory_space<vmem>>, vector<8x128xf32>
      %cst_17 = arith.constant dense<0.000000e+00> : vector<8xf32>
      %22 = vector.multi_reduction <add>, %21, %cst_17 [1] : vector<8x128xf32> to vector<8xf32>
      %23 = vector.shape_cast %22 : vector<8xf32> to vector<8x1xf32>
      %cst_18 = arith.constant 2.560000e+02 : f32
      %24 = vector.broadcast %cst_18 : f32 to vector<8x1xf32>
      %25 = arith.divf %20, %24 : vector<8x1xf32>
      %cst_19 = arith.constant 2.560000e+02 : f32
      %26 = vector.broadcast %cst_19 : f32 to vector<8x1xf32>
      %27 = arith.mulf %26, %25 : vector<8x1xf32>
      %28 = arith.mulf %27, %25 : vector<8x1xf32>
      %29 = arith.subf %23, %28 : vector<8x1xf32>
      %cst_20 = arith.constant 2.560000e+02 : f32
      %cst_21 = arith.constant 1.000000e+00 : f32
      %30 = arith.subf %cst_20, %cst_21 : f32
      %31 = vector.broadcast %30 : f32 to vector<8x1xf32>
      %32 = arith.divf %29, %31 : vector<8x1xf32>
      %cst_22 = arith.constant 0.000000e+00 : f32
      %33 = vector.broadcast %cst_22 : f32 to vector<8x1xf32>
      %34 = arith.maximumf %32, %33 : vector<8x1xf32>
      %35 = math.sqrt %34 : vector<8x1xf32>
      %c0_23 = arith.constant 0 : index
      %c0_24 = arith.constant 0 : index
      %36 = vector.load %arg3[%c0_23, %c0_24] : memref<8x1xf32, #tpu.memory_space<vmem>>, vector<8x1xf32>
      tpu.vector_store %arg3[%c0_23, %c0_24], %35 {strides = array<i32>} : memref<8x1xf32, #tpu.memory_space<vmem>>, vector<8x1xf32>,
    } else {
    }
    return
  }
  func.func @transform_0(%arg0: i32, %arg1: i32) -> (i32, i32) {
    %c0_i32 = arith.constant 0 : i32
    return %arg0, %arg1 : i32, i32
  }
  func.func @transform_1(%arg0: i32, %arg1: i32) -> (i32, i32) {
    %c0_i32 = arith.constant 0 : i32
    %c0_i32_0 = arith.constant 0 : i32
    return %arg0, %c0_i32 : i32, i32
  }
}

</mosaic_0001>

<llo_original>
// kernel: tpu_custom_call.1
$region0: #{tpu_custom_call.1}
  #allocation0 [shape = 'u32[]', space=smem, size = 0x4, offset = 0x4, fixed_abs, tag = 'smem constant byte address 0x4 - core index']
  #allocation1 [shape = 'u32[144,128]{1,0:T(1,128)}', space=vmem, size = 0x12000, scoped, tag = 'internal scratch']
  #allocation2 [shape = 'f32[8,128]{1,0:T(8,128)}', space=vmem, size = 0x1000, scoped, tag = 'scratch operand']
  #allocation3 [shape = 'f32[8,128]{1,0:T(8,128)}', space=vmem, size = 0x1000, scoped, tag = 'scratch operand']
  %s0 = inlined_call_operand.hbm [shape: f32[8,256], index: 0, kind: input, shape index: {}]
  %s1 = inlined_call_operand.vmem [shape: f32[8,1], index: 1, kind: output, shape index: {}]
  %s2 = sld [smem:[#allocation0]]
  $region26: #{tpu_custom_call.1} parent=0
    _
  %s4 = ssub.s32 1, %s2
  %s5 = scalar_select 0, %s4, %s2
  $region1: #{tpu_custom_call.1} parent=0
    #allocation4 [shape = 'u8[8192]{0}', space=vmem, size = 0x2000, scoped, tag = 'input window, operand 0, single buffered']
    #allocation5 [shape = 's32[1]{0}', space=sflag, size = 0x4, scoped, tag = 'scoped memory for tpu_custom_call.1']
    %6 = vsyncpa [#allocation5], 0
    // Predicated region
    $region2: #{tpu_custom_call.1} parent=1 // pred_check
      _
    $region3: #{tpu_custom_call.1} parent=1 // pred_check_branch
      %8 = sbr.rel (0) target = $region5
    $region4: #{tpu_custom_call.1} parent=1 // pred_region
      %s10 = ssub.s32 256, 256
      %11 = vsyncadd [#allocation5], %s10
      %s13 = sshll.u32 [#allocation4], 4
      %s14 = int_to_ptr.vmem [resolvable:$true] %s13
      %16 = dma.hbm_to_vmem [thread:$0]  %s0, 256, %s14, [#allocation5]
    $region5: #{tpu_custom_call.1} parent=1 // pred_fallthru
      _
    // Predicated region
    $region6: #{tpu_custom_call.1} parent=1 // pred_check
      _
    $region7: #{tpu_custom_call.1} parent=1 // pred_check_branch
      %18 = sbr.rel (0) target = $region9
    $region8: #{tpu_custom_call.1} parent=1 // pred_region
      %19 = dma.done [#allocation5], 256
    $region9: #{tpu_custom_call.1} parent=1 // pred_fallthru
      _
    %p20 = scmp.eq.s32.totalorder 0, 0
    // Predicated region
    $region10: #{tpu_custom_call.1} parent=1 // pred_check
      %p21 = pneg %p20
    $region11: #{tpu_custom_call.1} parent=1 // pred_check_branch
      %23 = sbr.rel (%p21) target = $region13
    $region12: #{tpu_custom_call.1} parent=1 // pred_region
      %24 = vst [vmem:[#allocation2] sm:$0xff] 0.0
      %25 = vst [vmem:[#allocation3] sm:$0xff] 0.0
    $region13: #{tpu_custom_call.1} parent=1 // pred_fallthru
      _
    %v26 = vld [vmem:[#allocation2] sm:$0xff]
    %v27 = vld [vmem:[#allocation3] sm:$0xff]
    %v28 = vld [vmem:[#allocation4] sm:$0xff]
    %v29 = vadd.f32 %v26, %v28
    %v30 = vmul.f32 %v28, %v28
    %v31 = vadd.f32 %v27, %v30
    %v32 = vld [vmem:[#allocation4 + $0x8] sm:$0xff]
    %v33 = vadd.f32 %v29, %v32
    %v34 = vmul.f32 %v32, %v32
    %v35 = vadd.f32 %v31, %v34
    %36 = vst [vmem:[#allocation2] sm:$0xff] %v33
    %37 = vst [vmem:[#allocation3] sm:$0xff] %v35
    // Predicated region
    $region14: #{tpu_custom_call.1} parent=1 // pred_check
      %p38 = pneg %p20
    $region15: #{tpu_custom_call.1} parent=1 // pred_check_branch
      %40 = sbr.rel (%p38) target = $region17
    $region16: #{tpu_custom_call.1} parent=1 // pred_region
      %v41 = vld [vmem:[#allocation2] sm:$0xff]
      %42 = vadd.xlane.f32.xlu0 %v41
      %v43 = vpop.xlane.xlu0 %42
      %v44 = vld [vmem:[#allocation3] sm:$0xff]
      %45 = vadd.xlane.f32.xlu0 %v44
      %v46 = vpop.xlane.xlu0 %45
      %v47 = vrcp.pop 256.0
      %v48 = vmul.f32 %v43, %v47
      %v49 = vmul.f32 %v48, 256.0
      %v50 = vmul.f32 %v49, %v48
      %v51 = vsub.f32 %v46, %v50
      %v52 = vrcp.pop 255.0
      %v53 = vmul.f32 %v51, %v52
      %v54 = vmax.f32 %v53, 0.0
      %v55 = vrsqrt.pop %v54
      %v56 = vmul.f32 %v54, %v55
      %vm57 = vcmp.eq.f32.partialorder %v54, inf
      %v58 = vsel %vm57, %v54, %v56
      %vm59 = vcmp.eq.f32.partialorder %v54, 0.0
      %v60 = vand.u32 %v54, 2147483648
      %v61 = vsel %vm59, %v60, %v58
      %vm62 = vcmask 7168
      %63 = vst.msk [vmem:[%s1] sm:$0xff] %vm62, %v61
    $region17: #{tpu_custom_call.1} parent=1 // pred_fallthru
      _
    // Predicated region
    $region18: #{tpu_custom_call.1} parent=1 // pred_check
      _
    $region19: #{tpu_custom_call.1} parent=1 // pred_check_branch
      %65 = sbr.rel (0) target = $region21
    $region20: #{tpu_custom_call.1} parent=1 // pred_region
      _
    $region21: #{tpu_custom_call.1} parent=1 // pred_fallthru
      _
    // Predicated region
    $region22: #{tpu_custom_call.1} parent=1 // pred_check
      _
    $region23: #{tpu_custom_call.1} parent=1 // pred_check_branch
      %67 = sbr.rel (0) target = $region25
    $region24: #{tpu_custom_call.1} parent=1 // pred_region
      _
    $region25: #{tpu_custom_call.1} parent=1 // pred_fallthru
      _
    %68 = vsyncpa [#allocation5], 1

</llo_original>
